<compile_context>
chip_gen: v6e
topology: v6e:2x2x1
jax: 0.10.0
libtpu: 0.0.40
codegen_flags: <defaults>
</compile_context>

<pallas_src>
import functools

import jax
import jax.numpy as jnp
from jax.experimental import pallas as pl
from jax.experimental.pallas import tpu as pltpu


def _swish_kernel(x_ref, o_ref, *, beta):
    x = x_ref[...]
    xf = x.astype(jnp.float32)
    y = xf * jax.nn.sigmoid(beta * xf)
    o_ref[...] = y.astype(o_ref.dtype)


# Widest lane-dense slab widths to try (all multiples of 128).
_LANE_CANDIDATES = (8192, 4096, 2048, 1024, 512, 256, 128)
# ~2 MiB per block buffer: with double-buffered input + output that is ~8 MiB
# of pipeline VMEM — safe under the default scoped limits of v5e/v6e/v7x.
_BLOCK_BYTES = 2 * 1024 * 1024


def swish(x, beta: float = 1.0):
    """Swish / SiLU with beta, matching torch: x * sigmoid(beta * x)."""
    orig_shape = x.shape
    orig_dtype = x.dtype
    itemsize = jnp.dtype(orig_dtype).itemsize
    # Minimum packed sublane tile: 8 rows (32-bit), 16 (bf16/f16), 32 (i8/fp8).
    sublane_min = max(8, 32 // itemsize)

    n = x.size
    flat = x.reshape(-1)

    # Pick the widest lane width that divides n exactly -> no pad, no slice,
    # no extra HBM passes outside the kernel.
    lanes = None
    for cand in _LANE_CANDIDATES:
        if n % cand == 0:
            lanes = cand
            break

    n_pad = 0
    if lanes is None:
        # Awkward size: pad only up to one lane-row of a 1024-wide slab.
        lanes = 1024
        n_pad = (-n) % lanes
        flat = jnp.concatenate([flat, jnp.zeros((n_pad,), dtype=orig_dtype)])

    rows = flat.size // lanes
    x2d = flat.reshape(rows, lanes)

    # MiB-class row tile, rounded down to the dtype's sublane granularity.
    block_rows = (_BLOCK_BYTES // (lanes * itemsize)) // sublane_min * sublane_min
    block_rows = max(sublane_min, block_rows)
    if rows <= block_rows:
        # Full row extent is always a legal block shape (equals array dim).
        block_rows = rows
    grid = (pl.cdiv(rows, block_rows),)

    kernel = functools.partial(_swish_kernel, beta=float(beta))

    out2d = pl.pallas_call(
        kernel,
        out_shape=jax.ShapeDtypeStruct((rows, lanes), orig_dtype),
        grid_spec=pltpu.PrefetchScalarGridSpec(
            num_scalar_prefetch=0,
            grid=grid,
            in_specs=[pl.BlockSpec((block_rows, lanes), lambda i: (i, 0))],
            out_specs=pl.BlockSpec((block_rows, lanes), lambda i: (i, 0)),
        ),
        compiler_params=pltpu.CompilerParams(
            dimension_semantics=("parallel",),
        ),
    )(x2d)

    out_flat = out2d.reshape(-1)
    if n_pad:
        out_flat = out_flat[:n]
    return out_flat.reshape(orig_shape)


def swish_ref(x, beta: float = 1.0):
    xf = x.astype(jnp.float32)
    return (xf * jax.nn.sigmoid(beta * xf)).astype(x.dtype)


if __name__ == "__main__":
    key = jax.random.PRNGKey(0)

    # Main check: NCHW f32 input, typical conv-block usage of Swish.
    x = jax.random.normal(key, (2, 4, 16, 16), dtype=jnp.float32)
    beta = 1.0
    y = jax.block_until_ready(swish(x, beta=beta))
    y_ref = swish_ref(x, beta=beta)
    assert y.shape == x.shape and y.dtype == x.dtype
    assert jnp.allclose(y, y_ref, atol=1e-6, rtol=1e-6)

    # Awkward (non-multiple-of-128) size exercises the padded / ragged path.
    k2 = jax.random.PRNGKey(1)
    x_odd = jax.random.normal(k2, (3, 5, 7), dtype=jnp.float32)
    y_odd = jax.block_until_ready(swish(x_odd, beta=1.5))
    assert jnp.allclose(y_odd, swish_ref(x_odd, beta=1.5), atol=1e-6, rtol=1e-6)

    # bf16 path (16-row sublane minimum, f32 compute inside the kernel).
    k3 = jax.random.PRNGKey(2)
    x_bf = jax.random.normal(k3, (2, 4, 16, 16), dtype=jnp.bfloat16)
    y_bf = jax.block_until_ready(swish(x_bf, beta=beta))
    assert y_bf.dtype == jnp.bfloat16
    assert jnp.allclose(y_bf.astype(jnp.float32),
                        swish_ref(x_bf, beta=beta).astype(jnp.float32),
                        atol=1e-2, rtol=1e-2)

    print("KERNEL_OK")
</pallas_src>

<mosaic_0001>
module attributes {stable_mosaic.version = 11 : i64} {
  func.func @_swish_kernel(%arg0: i32, %arg1: memref<1x2048xf32, #tpu.memory_space<vmem>>, %arg2: memref<1x2048xf32, #tpu.memory_space<vmem>>) attributes {dimension_semantics = [#tpu.dimension_semantics<parallel>], iteration_bounds = array<i64: 1>, scalar_prefetch = 0 : i64, scratch_operands = 0 : i64, tpu.core_type = #tpu.core_type<tc>, window_params = [{transform_indices = @transform_0, window_bounds = array<i64: 1, 2048>}, {transform_indices = @transform_1, window_bounds = array<i64: 1, 2048>}]} {
    %c0 = arith.constant 0 : index
    %c0_0 = arith.constant 0 : index
    %0 = vector.load %arg1[%c0, %c0_0] : memref<1x2048xf32, #tpu.memory_space<vmem>>, vector<1x2048xf32>
    %cst = arith.constant 1.000000e+00 : f32
    %1 = vector.broadcast %cst : f32 to vector<1x2048xf32>
    %2 = arith.mulf %1, %0 : vector<1x2048xf32>
    %3 = arith.negf %2 : vector<1x2048xf32>
    %4 = math.exp %3 : vector<1x2048xf32>
    %cst_1 = arith.constant 1.000000e+00 : f32
    %5 = vector.broadcast %cst_1 : f32 to vector<1x2048xf32>
    %6 = arith.addf %5, %4 : vector<1x2048xf32>
    %7 = arith.divf %5, %6 : vector<1x2048xf32>
    %8 = arith.mulf %0, %7 : vector<1x2048xf32>
    %c0_2 = arith.constant 0 : index
    %c0_3 = arith.constant 0 : index
    %9 = vector.load %arg2[%c0_2, %c0_3] : memref<1x2048xf32, #tpu.memory_space<vmem>>, vector<1x2048xf32>
    tpu.vector_store %arg2[%c0_2, %c0_3], %8 {strides = array<i32>} : memref<1x2048xf32, #tpu.memory_space<vmem>>, vector<1x2048xf32>,
    return
  }
  func.func @transform_0(%arg0: i32) -> (i32, i32) {
    %c0_i32 = arith.constant 0 : i32
    %c0_i32_0 = arith.constant 0 : i32
    return %arg0, %c0_i32 : i32, i32
  }
  func.func @transform_1(%arg0: i32) -> (i32, i32) {
    %c0_i32 = arith.constant 0 : i32
    %c0_i32_0 = arith.constant 0 : i32
    return %arg0, %c0_i32 : i32, i32
  }
}

</mosaic_0001>

<llo_original>
// kernel: tpu_custom_call.1
$region0: #{tpu_custom_call.1}
  #allocation0 [shape = 'u32[]', space=smem, size = 0x4, offset = 0x4, fixed_abs, tag = 'smem constant byte address 0x4 - core index']
  #allocation1 [shape = 'u32[144,128]{1,0:T(1,128)}', space=vmem, size = 0x12000, scoped, tag = 'internal scratch']
  %s0 = inlined_call_operand.hbm [shape: f32[1,2048], index: 0, kind: input, shape index: {}]
  %s1 = inlined_call_operand.hbm [shape: f32[1,2048], index: 1, kind: output, shape index: {}]
  %s2 = sld [smem:[#allocation0]]
  $region18: #{tpu_custom_call.1} parent=0
    _
  %s4 = ssub.s32 1, %s2
  %s5 = scalar_select 0, %s4, %s2
  $region1: #{tpu_custom_call.1} parent=0
    #allocation2 [shape = 'u8[8192]{0}', space=vmem, size = 0x2000, scoped, tag = 'input window, operand 0, single buffered']
    #allocation3 [shape = 's32[1]{0}', space=sflag, size = 0x4, scoped, tag = 'scoped memory for tpu_custom_call.1']
    #allocation4 [shape = 's32[1]{0}', space=sflag, size = 0x4, scoped, tag = 'scoped memory for tpu_custom_call.1']
    #allocation5 [shape = 'u8[8192]{0}', space=vmem, size = 0x2000, scoped, tag = 'output window, operand 0, single buffered']
    %6 = vsyncpa [#allocation3], 0
    %7 = vsyncpa [#allocation4], 0
    // Predicated region
    $region2: #{tpu_custom_call.1} parent=1 // pred_check
      _
    $region3: #{tpu_custom_call.1} parent=1 // pred_check_branch
      %9 = sbr.rel (0) target = $region5
    $region4: #{tpu_custom_call.1} parent=1 // pred_region
      %s11 = ssub.s32 256, 256
      %12 = vsyncadd [#allocation3], %s11
      %s14 = sshll.u32 [#allocation2], 4
      %s15 = int_to_ptr.vmem [resolvable:$true] %s14
      %17 = dma.hbm_to_vmem [thread:$0]  %s0, 256, %s15, [#allocation3]
    $region5: #{tpu_custom_call.1} parent=1 // pred_fallthru
      _
    // Predicated region
    $region6: #{tpu_custom_call.1} parent=1 // pred_check
      _
    $region7: #{tpu_custom_call.1} parent=1 // pred_check_branch
      %19 = sbr.rel (0) target = $region9
    $region8: #{tpu_custom_call.1} parent=1 // pred_region
      %20 = dma.done [#allocation3], 256
    $region9: #{tpu_custom_call.1} parent=1 // pred_fallthru
      _
    %v21 = vld [vmem:[#allocation2] sm:$0xff]
    %v22 = vld [vmem:[#allocation2 + $0x8] sm:$0xff]
    %v23 = vxor.u32 %v21, 2147483648
    %v24 = vxor.u32 %v22, 2147483648
    %v25 = vmul.f32 %v23, 1.442695
    %v26 = vpow.pop %v25
    %v27 = vmul.f32 %v24, 1.442695
    %v28 = vpow.pop %v27
    %v29 = vadd.f32 %v26, 1.0
    %v30 = vadd.f32 %v28, 1.0
    %v31 = vrcp.pop %v29
    %v32 = vmul.f32 1.0, %v31
    %v33 = vrcp.pop %v30
    %v34 = vmul.f32 1.0, %v33
    %v35 = vmul.f32 %v21, %v32
    %v36 = vmul.f32 %v22, %v34
    %37 = vst [vmem:[#allocation5] sm:$0xff] %v35
    %38 = vst [vmem:[#allocation5 + $0x8] sm:$0xff] %v36
    // Predicated region
    $region10: #{tpu_custom_call.1} parent=1 // pred_check
      _
    $region11: #{tpu_custom_call.1} parent=1 // pred_check_branch
      %40 = sbr.rel (0) target = $region13
    $region12: #{tpu_custom_call.1} parent=1 // pred_region
      %s42 = ssub.s32 256, 256
      %43 = vsyncadd [#allocation4], %s42
      %s45 = sshll.u32 [#allocation5], 4
      %s46 = int_to_ptr.vmem [resolvable:$true] %s45
      %48 = dma.vmem_to_hbm [thread:$0]  %s46, 256, %s1, [#allocation4]
    $region13: #{tpu_custom_call.1} parent=1 // pred_fallthru
      _
    // Predicated region
    $region14: #{tpu_custom_call.1} parent=1 // pred_check
      _
    $region15: #{tpu_custom_call.1} parent=1 // pred_check_branch
      %50 = sbr.rel (0) target = $region17
    $region16: #{tpu_custom_call.1} parent=1 // pred_region
      %51 = dma.done [#allocation4], 256
    $region17: #{tpu_custom_call.1} parent=1 // pred_fallthru
      _
    %52 = vsyncpa [#allocation3], 1
    %53 = vsyncpa [#allocation4], 1

</llo_original>
